<compile_context>
chip_gen: v7x
topology: tpu7x:2x2x1
jax: 0.10.0
libtpu: 0.0.40
codegen_flags: <defaults>
</compile_context>

<pallas_src>
import functools

import jax
import jax.numpy as jnp
from jax.experimental import pallas as pl
from jax.experimental.pallas import tpu as pltpu

LN_EPS = 1e-6
LANE = 128
SUBLANE = 8

# Per-buffer VMEM budget for the (double-buffered) x input block; conservative enough to fit
# alongside the weight/output blocks inside v7x's 64 MiB VMEM at real image sizes.
_X_BUFFER_BUDGET_BYTES = 10 * 2**20
_VMEM_LIMIT_CAP_BYTES = 48 * 2**20


def _round_up(x: int, m: int) -> int:
    return ((x + m - 1) // m) * m


def _mxu_m_target() -> int:
    """Full-height MXU M tile: 256 on v6e/v7x, 128 on v5e (best-effort device sniff)."""
    try:
        kind = jax.devices()[0].device_kind.lower()
    except Exception:
        return 256
    if "v5 lite" in kind or "v5e" in kind or "v5lite" in kind:
        return 128
    return 256


def _pick_batch_tile(n: int, c: int, hw: int, itemsize: int = 4) -> int:
    """Batch rows per grid step.

    Targets a full MXU M pass, stays inside a VMEM budget for the double-buffered x block
    (accounting for the C -> 8 sublane padding of the (bt, C, HW) tile), and keeps >= 2
    (preferably an even number of) grid steps when N allows so ("parallel",) can shard
    across v7x's two TensorCores.
    """
    if n < 16:
        # Single full-dim block: every block dim equals the array dim, which trivially
        # satisfies the (8, 128) tiling rule for small N.
        return n

    # Padded VMEM bytes of one batch row inside the x block (f32, (8,128) tiling).
    row_bytes = _round_up(c, SUBLANE) * _round_up(hw, LANE) * itemsize
    bt_vmem = max(SUBLANE, (_X_BUFFER_BUDGET_BYTES // row_bytes) // SUBLANE * SUBLANE)
    # TODO(synk): at huge HW (e.g. 224x224 on v7x) prefer an extra "arbitrary" HW grid axis
    # with a pooled-sum accumulator instead of shrinking bt below a full MXU pass.

    bt_mxu = _mxu_m_target()
    bt_mega = _round_up(pl.cdiv(n, 2), SUBLANE)          # keep >= 2 grid steps for megacore
    bt = min(bt_vmem, bt_mxu, bt_mega, _round_up(n, SUBLANE))
    bt = max(SUBLANE, bt // SUBLANE * SUBLANE)

    # Best-effort: avoid an odd step count > 1 (one v7x TensorCore would idle on the tail).
    steps = pl.cdiv(n, bt)
    if steps > 1 and steps % 2 == 1:
        bt_even = max(SUBLANE, _round_up(pl.cdiv(n, steps + 1), SUBLANE))
        if pl.cdiv(n, bt_even) % 2 == 0:
            bt = bt_even
    return bt


def _multihead_kernel(x_ref, ws_ref, vecs_ref, wf_ref, bf_ref, o_ref):
    # x_ref:    (Bt, Cin, HW)  NCHW batch tile with H,W merged; HW on the 128-wide lanes
    # ws_ref:   (Cin, F)       1x1-conv stem weight, pre-scaled by 1/HW (backbone stand-in)
    # vecs_ref: (3, F)         row 0: stem bias, row 1: LayerNorm gamma, row 2: LayerNorm beta
    # wf_ref:   (F, Kp)        fc weight of the selected head, pre-padded to a lane multiple
    # bf_ref:   (1, Kp)        fc bias (zero padded)
    # o_ref:    (Bt, Kp)       padded logits (lane-dense -> unmasked stores)
    x = x_ref[...]                                                       # (Bt, Cin, HW)

    # --- pool-before-stem: avg pool commutes with the pointwise (1x1) conv; the 1/HW scale
    #     is folded into ws, so the pool is a plain cross-lane sum. ---
    pooled = jnp.sum(x, axis=-1)                                         # (Bt, Cin)

    # --- backbone stand-in: pointwise conv == matmul on pooled channels (MXU) ---
    feat = jnp.dot(pooled, ws_ref[...],
                   preferred_element_type=jnp.float32) + vecs_ref[0:1, :]   # (Bt, F)

    # --- head norm: LayerNorm over channels, f32 math ---
    mu = jnp.mean(feat, axis=-1, keepdims=True)
    var = jnp.mean((feat - mu) * (feat - mu), axis=-1, keepdims=True)
    ln = (feat - mu) * jax.lax.rsqrt(var + LN_EPS)
    ln = ln * vecs_ref[1:2, :] + vecs_ref[2:3, :]                        # (Bt, F)

    # --- Flatten + Dropout(eval = identity) + Linear (lane-dense padded output) ---
    o_ref[...] = (jnp.dot(ln, wf_ref[...], preferred_element_type=jnp.float32)
                  + bf_ref[...]).astype(o_ref.dtype)


@functools.partial(jax.jit, static_argnames=("head_index",))
def multihead_model_forward(x_nchw, params, head_index: int):
    """Full forward: backbone-stem features -> head[head_index] logits, shape (N, K)."""
    N, C, H, W = x_nchw.shape
    HW = H * W

    # NCHW stays put: merging H and W is a free reshape (no transposed HBM copy of x) and
    # puts the dense HW axis on the 128-wide lanes.
    x = x_nchw.reshape(N, C, HW)
    if x.dtype != jnp.float32:
        x = x.astype(jnp.float32)

    # Fold the 1/HW average-pool scale into the (tiny, C x F) stem weight.
    w_stem = params["w_stem"] * (1.0 / HW)          # (C, F)
    vecs = params["ln_vecs"]                        # (3, F): [b_stem; gamma; beta]
    w_fc, b_fc = params["heads"][head_index]        # (F, Kp) pre-padded, (1, K) true width
    F = w_stem.shape[1]
    K = b_fc.shape[1]                               # static: the bias is kept unpadded
    Kp = w_fc.shape[1]                               # lane-dense, padded once at init
    b_fc = jnp.pad(b_fc, ((0, 0), (0, Kp - K)))      # padding the (1,K) bias is negligible

    bt = _pick_batch_tile(N, C, HW)
    grid = (pl.cdiv(N, bt),)

    # Footprint estimate -> raise the scoped VMEM limit when needed (v5e default is 16 MiB).
    # Every block is double-buffered by the auto-pipeliner.
    x_block = bt * _round_up(C, SUBLANE) * _round_up(HW, LANE) * 4
    w_block = (_round_up(C, SUBLANE) * _round_up(F, LANE)
               + _round_up(3, SUBLANE) * _round_up(F, LANE)
               + _round_up(F, SUBLANE) * Kp
               + SUBLANE * Kp) * 4
    o_block = _round_up(bt, SUBLANE) * Kp * 4
    vmem_need = 2 * (x_block + w_block + o_block)
    vmem_limit = int(min(max(vmem_need + (4 << 20), 32 << 20), _VMEM_LIMIT_CAP_BYTES))

    out_padded = pl.pallas_call(
        _multihead_kernel,
        out_shape=jax.ShapeDtypeStruct((N, Kp), jnp.float32),
        grid=grid,
        in_specs=[
            pl.BlockSpec((bt, C, HW), lambda b: (b, 0, 0)),
            # TODO(synk): the blocks below are grid-invariant; single-buffering them
            # (pl.Buffered(1) / one-shot scratch DMA) would free ~half their VMEM at real
            # backbone widths — left at the default double-buffering for robustness.
            pl.BlockSpec((C, F), lambda b: (0, 0)),
            pl.BlockSpec((3, F), lambda b: (0, 0)),
            pl.BlockSpec((F, Kp), lambda b: (0, 0)),
            pl.BlockSpec((1, Kp), lambda b: (0, 0)),
        ],
        out_specs=pl.BlockSpec((bt, Kp), lambda b: (b, 0)),
        compiler_params=pltpu.CompilerParams(
            dimension_semantics=("parallel",),
            vmem_limit_bytes=vmem_limit,
        ),
    )(x, w_stem, vecs, w_fc, b_fc)

    # Slice the lane padding back off (padded columns are exactly zero).
    return out_padded[:, :K]


def init_params(key, in_channels, num_features, num_head_classes):
    """Deterministic parameter init for the backbone stem + every head (MultiHeads).

    The fc weight of every head is pre-padded once to a lane multiple (Kp) so the jitted
    forward never re-pads the multi-MB weight; each bias keeps its true width K (static).
    """
    ks = jax.random.split(key, 2 + 2 * len(num_head_classes))
    b_stem = jax.random.normal(ks[1], (1, num_features), jnp.float32) * 0.01
    params = {
        "w_stem": jax.random.normal(ks[0], (in_channels, num_features), jnp.float32) * 0.1,
        # Row 0: stem bias, row 1: LayerNorm gamma, row 2: LayerNorm beta — one (3, F) block.
        "ln_vecs": jnp.concatenate(
            [b_stem,
             jnp.ones((1, num_features), jnp.float32),
             jnp.zeros((1, num_features), jnp.float32)], axis=0),
        "heads": [],
    }
    for i, k in enumerate(num_head_classes):
        kp = max(LANE, _round_up(k, LANE))
        w = jax.random.normal(ks[2 + 2 * i], (num_features, k), jnp.float32) * 0.05
        b = jax.random.normal(ks[3 + 2 * i], (1, k), jnp.float32) * 0.01
        params["heads"].append((jnp.pad(w, ((0, 0), (0, kp - k))), b))
    return params


def reference_forward(x_nchw, params, head_index):
    """Pure-JAX reference with the original per-pixel-stem -> pool ordering."""
    N, C, H, W = x_nchw.shape
    x = jnp.transpose(x_nchw, (0, 2, 3, 1)).reshape(N, H * W, C).astype(jnp.float32)
    b_stem = params["ln_vecs"][0:1]
    gamma = params["ln_vecs"][1:2]
    beta = params["ln_vecs"][2:3]
    feat = jnp.einsum("nsc,cf->nsf", x, params["w_stem"]) + b_stem
    pooled = jnp.mean(feat, axis=1)                                # (N, F) global avg pool
    mu = jnp.mean(pooled, axis=-1, keepdims=True)
    var = jnp.mean((pooled - mu) ** 2, axis=-1, keepdims=True)
    ln = (pooled - mu) * jax.lax.rsqrt(var + LN_EPS)
    ln = ln * gamma + beta
    w_fc_p, b_fc = params["heads"][head_index]
    k = b_fc.shape[1]
    return ln @ w_fc_p[:, :k] + b_fc


if __name__ == "__main__":
    # Small shapes consistent with the module: NCHW image, multi-head classifier.
    N, C, H, W = 2, 4, 16, 16
    num_features = 32
    num_head_classes = [10, 5]     # MultiHeads: one fc per head
    train_index = 0                # head used in forward()

    key = jax.random.PRNGKey(0)
    k_x, k_p = jax.random.split(key)
    x = jax.random.normal(k_x, (N, C, H, W), jnp.float32)
    params = init_params(k_p, C, num_features, num_head_classes)

    out = multihead_model_forward(x, params, train_index)
    out = jax.block_until_ready(out)

    ref = reference_forward(x, params, train_index)
    assert out.shape == (N, num_head_classes[train_index])
    assert jnp.allclose(out, ref, atol=1e-4, rtol=1e-4), (out, ref)

    print("KERNEL_OK")
</pallas_src>

<mosaic_0001>
module attributes {stable_mosaic.version = 11 : i64} {
  func.func @_multihead_kernel(%arg0: i32, %arg1: memref<2x4x256xf32, #tpu.memory_space<vmem>>, %arg2: memref<4x32xf32, #tpu.memory_space<vmem>>, %arg3: memref<3x32xf32, #tpu.memory_space<vmem>>, %arg4: memref<32x128xf32, #tpu.memory_space<vmem>>, %arg5: memref<1x128xf32, #tpu.memory_space<vmem>>, %arg6: memref<2x128xf32, #tpu.memory_space<vmem>>) attributes {dimension_semantics = [#tpu.dimension_semantics<parallel>], iteration_bounds = array<i64: 1>, scalar_prefetch = 0 : i64, scratch_operands = 0 : i64, tpu.core_type = #tpu.core_type<tc>, window_params = [{transform_indices = @transform_0, window_bounds = array<i64: 2, 4, 256>}, {pipeline_mode = #tpu.pipeline_mode<synchronous>, transform_indices = @transform_1, window_bounds = array<i64: 4, 32>}, {pipeline_mode = #tpu.pipeline_mode<synchronous>, transform_indices = @transform_2, window_bounds = array<i64: 3, 32>}, {pipeline_mode = #tpu.pipeline_mode<synchronous>, transform_indices = @transform_3, window_bounds = array<i64: 32, 128>}, {pipeline_mode = #tpu.pipeline_mode<synchronous>, transform_indices = @transform_4, window_bounds = array<i64: 1, 128>}, {transform_indices = @transform_5, window_bounds = array<i64: 2, 128>}]} {
    %c0 = arith.constant 0 : index
    %c0_0 = arith.constant 0 : index
    %c0_1 = arith.constant 0 : index
    %0 = vector.load %arg1[%c0, %c0_0, %c0_1] : memref<2x4x256xf32, #tpu.memory_space<vmem>>, vector<2x4x256xf32>
    %cst = arith.constant dense<0.000000e+00> : vector<2x4xf32>
    %1 = vector.multi_reduction <add>, %0, %cst [2] : vector<2x4x256xf32> to vector<2x4xf32>
    %c0_2 = arith.constant 0 : index
    %c0_3 = arith.constant 0 : index
    %2 = vector.load %arg2[%c0_2, %c0_3] : memref<4x32xf32, #tpu.memory_space<vmem>>, vector<4x32xf32>
    %cst_4 = arith.constant dense<0.000000e+00> : vector<2x32xf32>
    %3 = tpu.matmul %1, %2, %cst_4 {dimension_numbers = #tpu.dot_dimension_numbers<[1], [0], [0], [1], [0, 0, 1, 1], [], []>} : vector<2x4xf32>, vector<4x32xf32>, vector<2x32xf32> -> vector<2x32xf32>
    %c0_5 = arith.constant 0 : index
    %c0_6 = arith.constant 0 : index
    %4 = vector.load %arg3[%c0_5, %c0_6] : memref<3x32xf32, #tpu.memory_space<vmem>>, vector<1x32xf32>
    %5 = vector.broadcast %4 : vector<1x32xf32> to vector<2x32xf32>
    %6 = arith.addf %3, %5 : vector<2x32xf32>
    %cst_7 = arith.constant dense<0.000000e+00> : vector<2xf32>
    %7 = vector.multi_reduction <add>, %6, %cst_7 [1] : vector<2x32xf32> to vector<2xf32>
    %8 = vector.shape_cast %7 : vector<2xf32> to vector<2x1xf32>
    %cst_8 = arith.constant 3.200000e+01 : f32
    %9 = vector.broadcast %cst_8 : f32 to vector<2x1xf32>
    %10 = arith.divf %8, %9 : vector<2x1xf32>
    %11 = vector.broadcast %10 : vector<2x1xf32> to vector<2x32xf32>
    %12 = arith.subf %6, %11 : vector<2x32xf32>
    %13 = vector.broadcast %10 : vector<2x1xf32> to vector<2x32xf32>
    %14 = arith.subf %6, %13 : vector<2x32xf32>
    %15 = arith.mulf %12, %14 : vector<2x32xf32>
    %cst_9 = arith.constant dense<0.000000e+00> : vector<2xf32>
    %16 = vector.multi_reduction <add>, %15, %cst_9 [1] : vector<2x32xf32> to vector<2xf32>
    %17 = vector.shape_cast %16 : vector<2xf32> to vector<2x1xf32>
    %cst_10 = arith.constant 3.200000e+01 : f32
    %18 = vector.broadcast %cst_10 : f32 to vector<2x1xf32>
    %19 = arith.divf %17, %18 : vector<2x1xf32>
    %20 = vector.broadcast %10 : vector<2x1xf32> to vector<2x32xf32>
    %21 = arith.subf %6, %20 : vector<2x32xf32>
    %cst_11 = arith.constant 9.99999997E-7 : f32
    %22 = vector.broadcast %cst_11 : f32 to vector<2x1xf32>
    %23 = arith.addf %19, %22 : vector<2x1xf32>
    %24 = math.rsqrt %23 : vector<2x1xf32>
    %25 = vector.broadcast %24 : vector<2x1xf32> to vector<2x32xf32>
    %26 = arith.mulf %21, %25 : vector<2x32xf32>
    %c1 = arith.constant 1 : index
    %c0_12 = arith.constant 0 : index
    %27 = vector.load %arg3[%c1, %c0_12] : memref<3x32xf32, #tpu.memory_space<vmem>>, vector<1x32xf32>
    %28 = vector.broadcast %27 : vector<1x32xf32> to vector<2x32xf32>
    %29 = arith.mulf %26, %28 : vector<2x32xf32>
    %c2 = arith.constant 2 : index
    %c0_13 = arith.constant 0 : index
    %30 = vector.load %arg3[%c2, %c0_13] : memref<3x32xf32, #tpu.memory_space<vmem>>, vector<1x32xf32>
    %31 = vector.broadcast %30 : vector<1x32xf32> to vector<2x32xf32>
    %32 = arith.addf %29, %31 : vector<2x32xf32>
    %c0_14 = arith.constant 0 : index
    %c0_15 = arith.constant 0 : index
    %33 = vector.load %arg4[%c0_14, %c0_15] : memref<32x128xf32, #tpu.memory_space<vmem>>, vector<32x128xf32>
    %cst_16 = arith.constant dense<0.000000e+00> : vector<2x128xf32>
    %34 = tpu.matmul %32, %33, %cst_16 {dimension_numbers = #tpu.dot_dimension_numbers<[1], [0], [0], [1], [0, 0, 1, 1], [], []>} : vector<2x32xf32>, vector<32x128xf32>, vector<2x128xf32> -> vector<2x128xf32>
    %c0_17 = arith.constant 0 : index
    %c0_18 = arith.constant 0 : index
    %35 = vector.load %arg5[%c0_17, %c0_18] : memref<1x128xf32, #tpu.memory_space<vmem>>, vector<1x128xf32>
    %36 = vector.broadcast %35 : vector<1x128xf32> to vector<2x128xf32>
    %37 = arith.addf %34, %36 : vector<2x128xf32>
    %c0_19 = arith.constant 0 : index
    %c0_20 = arith.constant 0 : index
    %38 = vector.load %arg6[%c0_19, %c0_20] : memref<2x128xf32, #tpu.memory_space<vmem>>, vector<2x128xf32>
    tpu.vector_store %arg6[%c0_19, %c0_20], %37 {strides = array<i32>} : memref<2x128xf32, #tpu.memory_space<vmem>>, vector<2x128xf32>,
    return
  }
  func.func @transform_0(%arg0: i32) -> (i32, i32, i32) {
    %c0_i32 = arith.constant 0 : i32
    %c0_i32_0 = arith.constant 0 : i32
    %c0_i32_1 = arith.constant 0 : i32
    return %arg0, %c0_i32, %c0_i32_0 : i32, i32, i32
  }
  func.func @transform_1(%arg0: i32) -> (i32, i32) {
    %c0_i32 = arith.constant 0 : i32
    %c0_i32_0 = arith.constant 0 : i32
    %c0_i32_1 = arith.constant 0 : i32
    return %c0_i32, %c0_i32_0 : i32, i32
  }
  func.func @transform_2(%arg0: i32) -> (i32, i32) {
    %c0_i32 = arith.constant 0 : i32
    %c0_i32_0 = arith.constant 0 : i32
    %c0_i32_1 = arith.constant 0 : i32
    return %c0_i32, %c0_i32_0 : i32, i32
  }
  func.func @transform_3(%arg0: i32) -> (i32, i32) {
    %c0_i32 = arith.constant 0 : i32
    %c0_i32_0 = arith.constant 0 : i32
    %c0_i32_1 = arith.constant 0 : i32
    return %c0_i32, %c0_i32_0 : i32, i32
  }
  func.func @transform_4(%arg0: i32) -> (i32, i32) {
    %c0_i32 = arith.constant 0 : i32
    %c0_i32_0 = arith.constant 0 : i32
    %c0_i32_1 = arith.constant 0 : i32
    return %c0_i32, %c0_i32_0 : i32, i32
  }
  func.func @transform_5(%arg0: i32) -> (i32, i32) {
    %c0_i32 = arith.constant 0 : i32
    %c0_i32_0 = arith.constant 0 : i32
    return %arg0, %c0_i32 : i32, i32
  }
}

</mosaic_0001>

<llo_original>
// kernel: multihead_model_forward.1
$region0: #{multihead_model_forward.1}
  #allocation0 [shape = 'u32[]', space=smem, size = 0x4, offset = 0x4, fixed_abs, tag = 'smem constant byte address 0x4 - core index']
  #allocation1 [shape = 'u32[144,128]{1,0:T(1,128)}', space=vmem, size = 0x12000, scoped, tag = 'internal scratch']
  %s0 = inlined_call_operand.vmem [shape: f32[2,4,256], index: 0, kind: input, shape index: {}]
  %s1 = inlined_call_operand.vmem [shape: f32[4,32], index: 1, kind: input, shape index: {}]
  %s2 = inlined_call_operand.vmem [shape: f32[3,32], index: 2, kind: input, shape index: {}]
  %s3 = inlined_call_operand.vmem [shape: f32[32,128], index: 3, kind: input, shape index: {}]
  %s4 = inlined_call_operand.vmem [shape: f32[1,128], index: 4, kind: input, shape index: {}]
  %s5 = inlined_call_operand.hbm [shape: f32[2,128], index: 5, kind: output, shape index: {}]
  %s6 = sld [smem:[#allocation0]]
  $region30: #{multihead_model_forward.1} parent=0
    _
  %s8 = ssub.s32 1, %s6
  %s9 = scalar_select 0, %s8, %s6
  $region1: #{multihead_model_forward.1} parent=0
    #allocation2 [shape = 'u8[1024]{0}', space=vmem, size = 0x400, scoped, tag = 'output window, operand 0, single buffered']
    #allocation3 [shape = 's32[1]{0}', space=sflag, size = 0x4, scoped, tag = 'scoped memory for multihead_model_forward.1']
    %10 = vsyncpa [#allocation3], 0
    // Predicated region
    $region2: #{multihead_model_forward.1} parent=1 // pred_check
      _
    $region3: #{multihead_model_forward.1} parent=1 // pred_check_branch
      %12 = sbr.rel (0) target = $region5
    $region4: #{multihead_model_forward.1} parent=1 // pred_region
      _
    $region5: #{multihead_model_forward.1} parent=1 // pred_fallthru
      _
    // Predicated region
    $region6: #{multihead_model_forward.1} parent=1 // pred_check
      _
    $region7: #{multihead_model_forward.1} parent=1 // pred_check_branch
      %14 = sbr.rel (0) target = $region9
    $region8: #{multihead_model_forward.1} parent=1 // pred_region
      _
    $region9: #{multihead_model_forward.1} parent=1 // pred_fallthru
      _
    // Predicated region
    $region10: #{multihead_model_forward.1} parent=1 // pred_check
      _
    $region11: #{multihead_model_forward.1} parent=1 // pred_check_branch
      %16 = sbr.rel (0) target = $region13
    $region12: #{multihead_model_forward.1} parent=1 // pred_region
      _
    $region13: #{multihead_model_forward.1} parent=1 // pred_fallthru
      _
    // Predicated region
    $region14: #{multihead_model_forward.1} parent=1 // pred_check
      _
    $region15: #{multihead_model_forward.1} parent=1 // pred_check_branch
      %18 = sbr.rel (0) target = $region17
    $region16: #{multihead_model_forward.1} parent=1 // pred_region
      _
    $region17: #{multihead_model_forward.1} parent=1 // pred_fallthru
      _
    // Predicated region
    $region18: #{multihead_model_forward.1} parent=1 // pred_check
      _
    $region19: #{multihead_model_forward.1} parent=1 // pred_check_branch
      %20 = sbr.rel (0) target = $region21
    $region20: #{multihead_model_forward.1} parent=1 // pred_region
      _
    $region21: #{multihead_model_forward.1} parent=1 // pred_fallthru
      _
    %v21 = vld [vmem:[%s0] sm:$0xff]
    %v22 = vld [vmem:[%s0 + $0x8] sm:$0xff]
    %v25 = vcombine.high %v21, %v21
    %v26 = vcombine.high %v22, %v22
    %vm29 = vcmask 1043456
    %v30 = vsel %vm29, %v21, 0.0
    %v31 = vsel %vm29, %v25, 0.0
    %v32 = vadd.f32 %v30, %v31
    %33 = vadd.xlane.f32.xlu0 %v32
    %v34 = vpop.xlane.xlu0 %33
    %v35 = vsel %vm29, %v22, 0.0
    %v36 = vsel %vm29, %v26, 0.0
    %v37 = vadd.f32 %v35, %v36
    %38 = vadd.xlane.f32.xlu0 %v37
    %v39 = vpop.xlane.xlu0 %38
    %v40 = vld [vmem:[%s1] sm:$0xf]
    %v41 = vld [vmem:[%s2] sm:$0x1]
    %v42 = vlaneseq
    %v43 = vshrl.u32 %v42, 7
    %v44 = vsub.s32 0, %v43
    %v45 = vrot.slane %v41, %v44
    %v48 = vlaneseq
    %v49 = vand.u32 %v48, 127
    %v50 = vlaneseq
    %v51 = vshrl.u32 %v50, 7
    %v52 = vsub.s32 %v49, %v51
    %v53 = vrot.slane %v34, %v52
    %v54 = vlaneseq
    %v55 = vshrl.u32 %v54, 7
    %v56 = vsub.s32 %v49, %v55
    %v57 = vrot.slane %v39, %v56
    %vm58 = vcmask 1041409
    %v59 = vsel %vm58, %v57, %v53
    %vm60 = vcmask 31744
    %v61 = vsel %vm60, %v59, 0
    %v64 = vsel %vm29, %v40, 0
    %66 = vmatprep.subr.mxu0 0.0
    %67 = vmatpush1.msra.mxu0 %v64
    %68 = vmatprep.subr.mxu0 0.0
    %69 = vmatpush1.msra.mxu0 0.0
    %70 = vmatprep.subr.mxu0 0.0
    %71 = vmatpush1.msra.mxu0 0.0
    %72 = vmatprep.subr.mxu0 0.0
    %73 = vmatpush1.msra.mxu0 0.0
    %74 = vmatprep.subr.mxu0 0.0
    %75 = vmatpush1.msra.mxu0 0.0
    %76 = vmatprep.subr.mxu0 0.0
    %77 = vmatpush1.msra.mxu0 0.0
    %78 = vmatprep.subr.mxu0 0.0
    %79 = vmatpush1.msra.mxu0 0.0
    %80 = vmatprep.subr.mxu0 0.0
    %81 = vmatpush1.msra.mxu0 0.0
    %82 = vmatprep.subr.mxu0 0.0
    %83 = vmatpush1.msra.mxu0 0.0
    %84 = vmatprep.subr.mxu0 0.0
    %85 = vmatpush1.msra.mxu0 0.0
    %86 = vmatprep.subr.mxu0 0.0
    %87 = vmatpush1.msra.mxu0 0.0
    %88 = vmatprep.subr.mxu0 0.0
    %89 = vmatpush1.msra.mxu0 0.0
    %90 = vmatprep.subr.mxu0 0.0
    %91 = vmatpush1.msra.mxu0 0.0
    %92 = vmatprep.subr.mxu0 0.0
    %93 = vmatpush1.msra.mxu0 0.0
    %94 = vmatprep.subr.mxu0 0.0
    %95 = vmatpush1.msra.mxu0 0.0
    %96 = vmatprep.subr.mxu0 0.0
    %97 = vmatpush1.msra.mxu0 0.0
    %98 = vmatprep.subr.mxu0 0.0
    %99 = vmatpush1.msra.mxu0 0.0
    %100 = vmatprep.subr.mxu0 0.0
    %101 = vmatpush1.msra.mxu0 0.0
    %102 = vmatprep.subr.mxu0 0.0
    %103 = vmatpush1.msra.mxu0 0.0
    %104 = vmatprep.subr.mxu0 0.0
    %105 = vmatpush1.msra.mxu0 0.0
    %106 = vmatprep.subr.mxu0 0.0
    %107 = vmatpush1.msra.mxu0 0.0
    %108 = vmatprep.subr.mxu0 0.0
    %109 = vmatpush1.msra.mxu0 0.0
    %110 = vmatprep.subr.mxu0 0.0
    %111 = vmatpush1.msra.mxu0 0.0
    %112 = vmatprep.subr.mxu0 0.0
    %113 = vmatpush1.msra.mxu0 0.0
    %114 = vmatprep.subr.mxu0 0.0
    %115 = vmatpush1.msra.mxu0 0.0
    %116 = vmatprep.subr.mxu0 0.0
    %117 = vmatpush1.msra.mxu0 0.0
    %118 = vmatprep.subr.mxu0 0.0
    %119 = vmatpush1.msra.mxu0 0.0
    %120 = vmatprep.subr.mxu0 0.0
    %121 = vmatpush1.msra.mxu0 0.0
    %122 = vmatprep.subr.mxu0 0.0
    %123 = vmatpush1.msra.mxu0 0.0
    %124 = vmatprep.subr.mxu0 0.0
    %125 = vmatpush1.msra.mxu0 0.0
    %126 = vmatprep.subr.mxu0 0.0
    %127 = vmatpush1.msra.mxu0 0.0
    %128 = vmatprep.subr.mxu0 0.0
    %129 = vmatpush1.msra.mxu0 0.0
    %130 = vmatprep.mubr.f32.mxu0 0.0
    %131 = vmatmul.mubr.f32.gmra.mrb[0].mxu0 %v61
    %v132 = vpop.f32.mrb[0].mxu0
    %v133 = vadd.f32 %v45, %v132
    %v134 = vpop.f32.mrb[0].mxu0
    %135 = vdwg.mxu0
    %vm136 = vcmask 254976
    %v137 = vsel %vm136, %v133, 0.0
    %138 = vadd.xlane.f32.xlu0 %v137
    %v139 = vpop.xlane.xlu0 %138
    %v140 = vrcp.pop 32.0
    %v141 = vmul.f32 %v139, %v140
    %v142 = vsub.f32 %v133, %v141
    %v143 = vmul.f32 %v142, %v142
    %v144 = vsel %vm136, %v143, 0.0
    %145 = vadd.xlane.f32.xlu0 %v144
    %v146 = vpop.xlane.xlu0 %145
    %v147 = vmul.f32 %v146, %v140
    %v148 = vadd.f32 %v147, 1e-06
    %v149 = vrsqrt.pop %v148
    %v150 = vmul.f32 %v142, %v149
    %v151 = vld [vmem:[%s2 + $0x1] sm:$0x1]
    %v152 = vlaneseq
    %v153 = vshrl.u32 %v152, 7
    %v154 = vsub.s32 0, %v153
    %v155 = vrot.slane %v151, %v154
    %v156 = vmul.f32 %v150, %v155
    %v157 = vld [vmem:[%s2 + $0x2] sm:$0x1]
    %v158 = vlaneseq
    %v159 = vshrl.u32 %v158, 7
    %v160 = vsub.s32 0, %v159
    %v161 = vrot.slane %v157, %v160
    %v162 = vadd.f32 %v156, %v161
    %v163 = vld [vmem:[%s3] sm:$0xff]
    %v164 = vld [vmem:[%s3 + $0x8] sm:$0xff]
    %v165 = vld [vmem:[%s3 + $0x10] sm:$0xff]
    %v166 = vld [vmem:[%s3 + $0x18] sm:$0xff]
    %v167 = vld [vmem:[%s4] sm:$0x1]
    %v169 = vlaneseq
    %v170 = vshrl.u32 %v169, 7
    %v171 = vsub.s32 0, %v170
    %v172 = vrot.slane %v167, %v171
    %vm174 = vcmask 261120
    %v176 = vsel %vm174, %v162, 0
    %178 = vmatprep.subr.mxu0 0.0
    %179 = vmatpush1.msra.mxu0 %v163
    %180 = vmatprep.subr.mxu0 0.0
    %181 = vmatpush1.msra.mxu0 %v164
    %182 = vmatprep.subr.mxu0 0.0
    %183 = vmatpush1.msra.mxu0 %v165
    %184 = vmatprep.subr.mxu0 0.0
    %185 = vmatpush1.msra.mxu0 %v166
    %186 = vmatprep.subr.mxu0 0.0
    %187 = vmatpush1.msra.mxu0 0.0
    %188 = vmatprep.subr.mxu0 0.0
    %189 = vmatpush1.msra.mxu0 0.0
    %190 = vmatprep.subr.mxu0 0.0
    %191 = vmatpush1.msra.mxu0 0.0
    %192 = vmatprep.subr.mxu0 0.0
    %193 = vmatpush1.msra.mxu0 0.0
    %194 = vmatprep.subr.mxu0 0.0
    %195 = vmatpush1.msra.mxu0 0.0
    %196 = vmatprep.subr.mxu0 0.0
    %197 = vmatpush1.msra.mxu0 0.0
    %198 = vmatprep.subr.mxu0 0.0
    %199 = vmatpush1.msra.mxu0 0.0
    %200 = vmatprep.subr.mxu0 0.0
    %201 = vmatpush1.msra.mxu0 0.0
    %202 = vmatprep.subr.mxu0 0.0
    %203 = vmatpush1.msra.mxu0 0.0
    %204 = vmatprep.subr.mxu0 0.0
    %205 = vmatpush1.msra.mxu0 0.0
    %206 = vmatprep.subr.mxu0 0.0
    %207 = vmatpush1.msra.mxu0 0.0
    %208 = vmatprep.subr.mxu0 0.0
    %209 = vmatpush1.msra.mxu0 0.0
    %210 = vmatprep.subr.mxu0 0.0
    %211 = vmatpush1.msra.mxu0 0.0
    %212 = vmatprep.subr.mxu0 0.0
    %213 = vmatpush1.msra.mxu0 0.0
    %214 = vmatprep.subr.mxu0 0.0
    %215 = vmatpush1.msra.mxu0 0.0
    %216 = vmatprep.subr.mxu0 0.0
    %217 = vmatpush1.msra.mxu0 0.0
    %218 = vmatprep.subr.mxu0 0.0
    %219 = vmatpush1.msra.mxu0 0.0
    %220 = vmatprep.subr.mxu0 0.0
    %221 = vmatpush1.msra.mxu0 0.0
    %222 = vmatprep.subr.mxu0 0.0
    %223 = vmatpush1.msra.mxu0 0.0
    %224 = vmatprep.subr.mxu0 0.0
    %225 = vmatpush1.msra.mxu0 0.0
    %226 = vmatprep.subr.mxu0 0.0
    %227 = vmatpush1.msra.mxu0 0.0
    %228 = vmatprep.subr.mxu0 0.0
    %229 = vmatpush1.msra.mxu0 0.0
    %230 = vmatprep.subr.mxu0 0.0
    %231 = vmatpush1.msra.mxu0 0.0
    %232 = vmatprep.subr.mxu0 0.0
    %233 = vmatpush1.msra.mxu0 0.0
    %234 = vmatprep.subr.mxu0 0.0
    %235 = vmatpush1.msra.mxu0 0.0
    %236 = vmatprep.subr.mxu0 0.0
    %237 = vmatpush1.msra.mxu0 0.0
    %238 = vmatprep.subr.mxu0 0.0
    %239 = vmatpush1.msra.mxu0 0.0
    %240 = vmatprep.subr.mxu0 0.0
    %241 = vmatpush1.msra.mxu0 0.0
    %242 = vmatprep.mubr.f32.mxu0 0.0
    %243 = vmatmul.mubr.f32.gmra.mrb[0].mxu0 %v176
    %v244 = vpop.f32.mrb[0].mxu0
    %v245 = vadd.f32 %v172, %v244
    %v246 = vpop.f32.mrb[0].mxu0
    %247 = vdwg.mxu0
    %248 = vst [vmem:[#allocation2] sm:$0x3] %v245
    // Predicated region
    $region22: #{multihead_model_forward.1} parent=1 // pred_check
      _
    $region23: #{multihead_model_forward.1} parent=1 // pred_check_branch
      %250 = sbr.rel (0) target = $region25
    $region24: #{multihead_model_forward.1} parent=1 // pred_region
      %s252 = ssub.s32 32, 32
      %253 = vsyncadd [#allocation3], %s252
      %s255 = sshll.u32 [#allocation2], 4
      %s256 = int_to_ptr.vmem [resolvable:$true] %s255
      %258 = dma.vmem_to_hbm [thread:$0]  %s256, 32, %s5, [#allocation3]
    $region25: #{multihead_model_forward.1} parent=1 // pred_fallthru
      _
    // Predicated region
    $region26: #{multihead_model_forward.1} parent=1 // pred_check
      _
    $region27: #{multihead_model_forward.1} parent=1 // pred_check_branch
      %260 = sbr.rel (0) target = $region29
    $region28: #{multihead_model_forward.1} parent=1 // pred_region
      %261 = dma.done [#allocation3], 32
    $region29: #{multihead_model_forward.1} parent=1 // pred_fallthru
      _
    %262 = vsyncpa [#allocation3], 1

</llo_original>
